<compile_context>
chip_gen: v5e
topology: v5e:2x2
jax: 0.10.0
libtpu: 0.0.40
codegen_flags: <defaults>
</compile_context>

<pallas_src>
import functools

import jax
import jax.numpy as jnp
from jax import lax
from jax.experimental import pallas as pl
from jax.experimental.pallas import tpu as pltpu


def _round_up(x: int, m: int) -> int:
    return ((x + m - 1) // m) * m


# --------------------------------------------------------------------------
# Stage 1: row-tiled MLP   z0 = relu(x @ w1 + b1) @ w2_pad + b2_pad
# --------------------------------------------------------------------------
def ghnn_mlp_kernel(x_ref, w1_ref, b1_ref, w2_ref, b2_ref, z0_ref):
    h = jnp.dot(x_ref[...], w1_ref[...], preferred_element_type=jnp.float32)
    h = jnp.maximum(h + b1_ref[...], 0.0)              # Linear + ReLU
    z = jnp.dot(h, w2_ref[...], preferred_element_type=jnp.float32)
    z0_ref[...] = z + b2_ref[...]                      # Linear (padded classes)


# --------------------------------------------------------------------------
# Stage 2: propagation + masked log_softmax
#   grid = (iterations, row tiles); the reduction (k) axis is collapsed.
#   zbuf scratch holds two full bf16 copies of z ([2*n_pad, c_pad]):
#   iteration `it` reads slot (it+1)%2 and writes slot it%2 (slot 1 is seeded
#   with z0 at it==0).  z0 itself stays VMEM-resident (constant-index input)
#   and supplies the alpha*x0 term every iteration.
# --------------------------------------------------------------------------
def ghnn_prop_kernel(z0_ref, a_ref, o_ref, zbuf_ref, *,
                     alpha, tm, n_pad, num_classes, carry_dtype, a_resident):
    it = pl.program_id(0)
    i = pl.program_id(1)
    n_it = pl.num_programs(0)

    row_off = pl.multiple_of(i * tm, tm)
    read_off = pl.multiple_of(((it + 1) % 2) * n_pad, tm)
    write_off = pl.multiple_of((it % 2) * n_pad + i * tm, tm)

    # One-time seed of the carry (slot 1) from the resident z0 copy.
    @pl.when(jnp.logical_and(it == 0, i == 0))
    def _():
        zbuf_ref[pl.ds(n_pad, n_pad), :] = z0_ref[...].astype(carry_dtype)

    # Row slab of ((1-alpha) * A_hat), bf16.
    if a_resident:
        a_tile = a_ref[pl.ds(row_off, tm), :]           # slice of resident A
    else:
        a_tile = a_ref[...]                             # streamed (tm, n_pad) slab

    z_prev = zbuf_ref[pl.ds(read_off, n_pad), :]        # [n_pad, c_pad] bf16
    new_tile = jnp.dot(a_tile, z_prev, preferred_element_type=jnp.float32)
    new_tile = new_tile + alpha * z0_ref[pl.ds(row_off, tm), :]   # + alpha * x0

    zbuf_ref[pl.ds(write_off, tm), :] = new_tile.astype(carry_dtype)

    @pl.when(it == n_it - 1)
    def _():
        # log_softmax over the real class lanes only (padded lanes -> -inf)
        lane = lax.broadcasted_iota(jnp.int32, new_tile.shape, 1)
        z = jnp.where(lane < num_classes, new_tile, -jnp.inf)
        m = jnp.max(z, axis=1, keepdims=True)
        shifted = z - m
        lse = jnp.log(jnp.sum(jnp.exp(shifted), axis=1, keepdims=True))
        o_ref[...] = shifted - lse


# --------------------------------------------------------------------------
# Wrapper
# --------------------------------------------------------------------------
def ghnn_forward(x, w1, b1, w2, b2, a_hat, *, iterations=10, alpha=0.1,
                 tm=256, a_dtype=jnp.bfloat16, carry_dtype=jnp.bfloat16):
    assert iterations >= 1
    assert tm % 256 == 0, "use 256-multiples to match the 256x256 MXU"

    n, f = x.shape
    hdim = w1.shape[1]
    c = w2.shape[1]
    a_bytes = jnp.dtype(a_dtype).itemsize
    carry_bytes = jnp.dtype(carry_dtype).itemsize

    n_pad = _round_up(max(n, tm), tm)                    # multiple of tm
    c_pad = _round_up(max(c, 128), 128)                  # lane-dense class dim
    n_i = n_pad // tm

    x_p = jnp.zeros((n_pad, f), jnp.float32).at[:n, :].set(x.astype(jnp.float32))
    w2_p = jnp.zeros((hdim, c_pad), jnp.float32).at[:, :c].set(w2)
    b2_p = jnp.zeros((c_pad,), jnp.float32).at[:c].set(b2)
    a_p = jnp.zeros((n_pad, n_pad), jnp.float32).at[:n, :n].set(a_hat)
    a_scaled = ((1.0 - alpha) * a_p).astype(a_dtype)     # fold (1-alpha) into A

    # ---- stage 1: MLP (weights tiny -> fully resident, rows pipelined) ----
    tm_mlp = next(t for t in (1024, 512, 256, 128, 8)
                  if t <= n_pad and n_pad % t == 0)
    z0 = pl.pallas_call(
        ghnn_mlp_kernel,
        grid=(n_pad // tm_mlp,),
        in_specs=[
            pl.BlockSpec((tm_mlp, f), lambda i: (i, 0)),
            pl.BlockSpec((f, hdim), lambda i: (0, 0)),
            pl.BlockSpec((1, hdim), lambda i: (0, 0)),
            pl.BlockSpec((hdim, c_pad), lambda i: (0, 0)),
            pl.BlockSpec((1, c_pad), lambda i: (0, 0)),
        ],
        out_specs=pl.BlockSpec((tm_mlp, c_pad), lambda i: (i, 0)),
        out_shape=jax.ShapeDtypeStruct((n_pad, c_pad), jnp.float32),
        compiler_params=pltpu.CompilerParams(dimension_semantics=("parallel",)),
    )(x_p, w1, b1.reshape(1, hdim), w2_p, b2_p.reshape(1, c_pad))

    # ---- stage 2: propagation + log_softmax ----
    def vmem_needed(resident):
        a_buf = n_pad * n_pad if resident else tm * n_pad
        return (2 * n_pad * c_pad * carry_bytes      # zbuf carry (bf16, 2 slots)
                + 2 * n_pad * c_pad * 4              # resident z0 (double-buffered)
                + 2 * tm * c_pad * 4                 # output double buffer
                + 2 * a_buf * a_bytes)               # A buffers

    VMEM_CAP = 56 * 1024 * 1024                      # safe on v5e/v6e/v7x
    a_resident = vmem_needed(True) + (4 << 20) <= VMEM_CAP
    vmem_limit = int(min(max(2 * vmem_needed(a_resident), 16 << 20), VMEM_CAP))

    if a_resident:
        # A is DMA'd once (constant block index) and stays resident across
        # all iterations; rows are sliced with pl.ds inside the kernel.
        a_spec = pl.BlockSpec((n_pad, n_pad), lambda it, i: (0, 0))
    else:
        # Row-slab streaming fallback (A re-read each iteration).
        # TODO(synk): re-introduce a k-tiled reduction axis for graphs whose
        # (tm, n_pad) slab does not fit in VMEM.
        a_spec = pl.BlockSpec((tm, n_pad), lambda it, i: (i, 0))

    a_reads = 1 if a_resident else iterations
    cost = pl.CostEstimate(
        flops=2 * iterations * n_pad * n_pad * c_pad,
        transcendentals=n_pad * c_pad,
        bytes_accessed=(a_reads * n_pad * n_pad * a_bytes   # A
                        + n_pad * c_pad * 4                 # z0 read once
                        + n_pad * c_pad * 4),               # final output write
    )

    last_it = iterations - 1
    kernel = functools.partial(
        ghnn_prop_kernel, alpha=alpha, tm=tm, n_pad=n_pad, num_classes=c,
        carry_dtype=carry_dtype, a_resident=a_resident)

    out_p = pl.pallas_call(
        kernel,
        grid=(iterations, n_i),
        in_specs=[
            # z0 / x0: full array, constant index -> DMA'd once, VMEM-resident.
            pl.BlockSpec((n_pad, c_pad), lambda it, i: (0, 0)),
            a_spec,
        ],
        out_specs=pl.BlockSpec(
            (tm, c_pad),
            # Output blocks only materialize during the final iteration: the
            # block index stays (0, 0) until then, so no intermediate
            # (uninitialized) writebacks to HBM ever occur.
            lambda it, i: (jnp.where(it == last_it, i, 0), 0)),
        out_shape=jax.ShapeDtypeStruct((n_pad, c_pad), jnp.float32),
        scratch_shapes=[
            pltpu.VMEM((2 * n_pad, c_pad), carry_dtype),   # double-buffered z carry
        ],
        compiler_params=pltpu.CompilerParams(
            # row axis must stay "arbitrary": the z carry couples all rows.
            dimension_semantics=("arbitrary", "arbitrary"),
            vmem_limit_bytes=vmem_limit,
        ),
        cost_estimate=cost,
    )(z0, a_scaled)

    return out_p[:n, :c]


# --------------------------------------------------------------------------
# Glue: normalized adjacency + deterministic parameter init (plain JAX)
# --------------------------------------------------------------------------
def normalized_adjacency(edge_index, num_nodes):
    """Dense  D^-1/2 (A + I) D^-1/2  from a [2, E] edge_index."""
    src, dst = edge_index[0], edge_index[1]
    adj = jnp.zeros((num_nodes, num_nodes), jnp.float32)
    adj = adj.at[src, dst].set(1.0)
    adj = adj.at[dst, src].set(1.0)                       # symmetric
    adj = adj + jnp.eye(num_nodes, dtype=jnp.float32)     # self loops
    deg = jnp.sum(adj, axis=1)
    d_inv_sqrt = jnp.where(deg > 0, 1.0 / jnp.sqrt(deg), 0.0)
    return adj * d_inv_sqrt[:, None] * d_inv_sqrt[None, :]


def init_params(key, num_features, hidden, num_classes):
    k1, k2, k3, k4 = jax.random.split(key, 4)
    lim1 = 1.0 / jnp.sqrt(num_features)
    lim2 = 1.0 / jnp.sqrt(hidden)
    w1 = jax.random.uniform(k1, (num_features, hidden), jnp.float32, -lim1, lim1)
    b1 = jax.random.uniform(k2, (hidden,), jnp.float32, -lim1, lim1)
    w2 = jax.random.uniform(k3, (hidden, num_classes), jnp.float32, -lim2, lim2)
    b2 = jax.random.uniform(k4, (num_classes,), jnp.float32, -lim2, lim2)
    return w1, b1, w2, b2


# --------------------------------------------------------------------------
# References
# --------------------------------------------------------------------------
def ghnn_ref_f32(x, w1, b1, w2, b2, a_hat, *, iterations=10, alpha=0.1):
    """Pure f32 module semantics (PyTorch eval forward)."""
    h = jnp.maximum(x @ w1 + b1, 0.0)
    z = h @ w2 + b2
    x0 = z
    for _ in range(iterations):
        z = (1.0 - alpha) * (a_hat @ z) + alpha * x0
    return jax.nn.log_softmax(z, axis=1)


def ghnn_ref_matched(x, w1, b1, w2, b2, a_hat, *, iterations=10, alpha=0.1,
                     a_dtype=jnp.bfloat16):
    """Reference mirroring the kernel's bf16-A / bf16-z / f32-accumulate math."""
    h = jnp.maximum(x @ w1 + b1, 0.0)
    z = h @ w2 + b2
    x0 = z
    a_s = ((1.0 - alpha) * a_hat).astype(a_dtype)
    for _ in range(iterations):
        z = jnp.dot(a_s, z.astype(a_dtype),
                    preferred_element_type=jnp.float32) + alpha * x0
    return jax.nn.log_softmax(z, axis=1)


if __name__ == "__main__":
    key = jax.random.PRNGKey(0)
    num_nodes, num_features, hidden, num_classes = 16, 8, 32, 4

    k_x, k_e, k_p = jax.random.split(key, 3)
    x = jax.random.normal(k_x, (num_nodes, num_features), jnp.float32)

    num_edges = 32
    edge_index = jax.random.randint(k_e, (2, num_edges), 0, num_nodes)

    a_hat = normalized_adjacency(edge_index, num_nodes)
    w1, b1, w2, b2 = init_params(k_p, num_features, hidden, num_classes)

    out = ghnn_forward(x, w1, b1, w2, b2, a_hat, iterations=10, alpha=0.1)
    out = jax.block_until_ready(out)
    assert out.shape == (num_nodes, num_classes)

    ref_m = ghnn_ref_matched(x, w1, b1, w2, b2, a_hat, iterations=10, alpha=0.1)
    assert jnp.allclose(out, ref_m, atol=1e-3, rtol=1e-3), \
        "mismatch vs matched-precision reference"

    ref_f = ghnn_ref_f32(x, w1, b1, w2, b2, a_hat, iterations=10, alpha=0.1)
    assert jnp.allclose(out, ref_f, atol=5e-2, rtol=5e-2), \
        "mismatch vs f32 module reference"

    print("KERNEL_OK")
</pallas_src>

<mosaic_0001>
module attributes {stable_mosaic.version = 11 : i64} {
  func.func @ghnn_mlp_kernel(%arg0: i32, %arg1: memref<256x8xf32, #tpu.memory_space<vmem>>, %arg2: memref<8x32xf32, #tpu.memory_space<vmem>>, %arg3: memref<1x32xf32, #tpu.memory_space<vmem>>, %arg4: memref<32x128xf32, #tpu.memory_space<vmem>>, %arg5: memref<1x128xf32, #tpu.memory_space<vmem>>, %arg6: memref<256x128xf32, #tpu.memory_space<vmem>>) attributes {dimension_semantics = [#tpu.dimension_semantics<parallel>], iteration_bounds = array<i64: 1>, scalar_prefetch = 0 : i64, scratch_operands = 0 : i64, tpu.core_type = #tpu.core_type<tc>, window_params = [{transform_indices = @transform_0, window_bounds = array<i64: 256, 8>}, {pipeline_mode = #tpu.pipeline_mode<synchronous>, transform_indices = @transform_1, window_bounds = array<i64: 8, 32>}, {pipeline_mode = #tpu.pipeline_mode<synchronous>, transform_indices = @transform_2, window_bounds = array<i64: 1, 32>}, {pipeline_mode = #tpu.pipeline_mode<synchronous>, transform_indices = @transform_3, window_bounds = array<i64: 32, 128>}, {pipeline_mode = #tpu.pipeline_mode<synchronous>, transform_indices = @transform_4, window_bounds = array<i64: 1, 128>}, {transform_indices = @transform_5, window_bounds = array<i64: 256, 128>}]} {
    %c0 = arith.constant 0 : index
    %c0_0 = arith.constant 0 : index
    %0 = vector.load %arg1[%c0, %c0_0] : memref<256x8xf32, #tpu.memory_space<vmem>>, vector<256x8xf32>
    %c0_1 = arith.constant 0 : index
    %c0_2 = arith.constant 0 : index
    %1 = vector.load %arg2[%c0_1, %c0_2] : memref<8x32xf32, #tpu.memory_space<vmem>>, vector<8x32xf32>
    %cst = arith.constant dense<0.000000e+00> : vector<256x32xf32>
    %2 = tpu.matmul %0, %1, %cst {dimension_numbers = #tpu.dot_dimension_numbers<[1], [0], [0], [1], [0, 0, 1, 1], [], []>} : vector<256x8xf32>, vector<8x32xf32>, vector<256x32xf32> -> vector<256x32xf32>
    %c0_3 = arith.constant 0 : index
    %c0_4 = arith.constant 0 : index
    %3 = vector.load %arg3[%c0_3, %c0_4] : memref<1x32xf32, #tpu.memory_space<vmem>>, vector<1x32xf32>
    %4 = vector.broadcast %3 : vector<1x32xf32> to vector<256x32xf32>
    %5 = arith.addf %2, %4 : vector<256x32xf32>
    %cst_5 = arith.constant 0.000000e+00 : f32
    %6 = vector.broadcast %cst_5 : f32 to vector<256x32xf32>
    %7 = arith.maximumf %5, %6 : vector<256x32xf32>
    %c0_6 = arith.constant 0 : index
    %c0_7 = arith.constant 0 : index
    %8 = vector.load %arg4[%c0_6, %c0_7] : memref<32x128xf32, #tpu.memory_space<vmem>>, vector<32x128xf32>
    %cst_8 = arith.constant dense<0.000000e+00> : vector<256x128xf32>
    %9 = tpu.matmul %7, %8, %cst_8 {dimension_numbers = #tpu.dot_dimension_numbers<[1], [0], [0], [1], [0, 0, 1, 1], [], []>} : vector<256x32xf32>, vector<32x128xf32>, vector<256x128xf32> -> vector<256x128xf32>
    %c0_9 = arith.constant 0 : index
    %c0_10 = arith.constant 0 : index
    %10 = vector.load %arg5[%c0_9, %c0_10] : memref<1x128xf32, #tpu.memory_space<vmem>>, vector<1x128xf32>
    %11 = vector.broadcast %10 : vector<1x128xf32> to vector<256x128xf32>
    %12 = arith.addf %9, %11 : vector<256x128xf32>
    %c0_11 = arith.constant 0 : index
    %c0_12 = arith.constant 0 : index
    %13 = vector.load %arg6[%c0_11, %c0_12] : memref<256x128xf32, #tpu.memory_space<vmem>>, vector<256x128xf32>
    tpu.vector_store %arg6[%c0_11, %c0_12], %12 {strides = array<i32>} : memref<256x128xf32, #tpu.memory_space<vmem>>, vector<256x128xf32>,
    return
  }
  func.func @transform_0(%arg0: i32) -> (i32, i32) {
    %c0_i32 = arith.constant 0 : i32
    %c0_i32_0 = arith.constant 0 : i32
    return %arg0, %c0_i32 : i32, i32
  }
  func.func @transform_1(%arg0: i32) -> (i32, i32) {
    %c0_i32 = arith.constant 0 : i32
    %c0_i32_0 = arith.constant 0 : i32
    %c0_i32_1 = arith.constant 0 : i32
    return %c0_i32, %c0_i32_0 : i32, i32
  }
  func.func @transform_2(%arg0: i32) -> (i32, i32) {
    %c0_i32 = arith.constant 0 : i32
    %c0_i32_0 = arith.constant 0 : i32
    %c0_i32_1 = arith.constant 0 : i32
    return %c0_i32, %c0_i32_0 : i32, i32
  }
  func.func @transform_3(%arg0: i32) -> (i32, i32) {
    %c0_i32 = arith.constant 0 : i32
    %c0_i32_0 = arith.constant 0 : i32
    %c0_i32_1 = arith.constant 0 : i32
    return %c0_i32, %c0_i32_0 : i32, i32
  }
  func.func @transform_4(%arg0: i32) -> (i32, i32) {
    %c0_i32 = arith.constant 0 : i32
    %c0_i32_0 = arith.constant 0 : i32
    %c0_i32_1 = arith.constant 0 : i32
    return %c0_i32, %c0_i32_0 : i32, i32
  }
  func.func @transform_5(%arg0: i32) -> (i32, i32) {
    %c0_i32 = arith.constant 0 : i32
    %c0_i32_0 = arith.constant 0 : i32
    return %arg0, %c0_i32 : i32, i32
  }
}

</mosaic_0001>

<llo_original>
// kernel: tpu_custom_call.1
$region0: #{tpu_custom_call.1}
  #allocation0 [shape = 'u32[]', space=smem, size = 0x4, offset = 0x4, fixed_abs, tag = 'smem constant byte address 0x4 - core index']
  #allocation1 [shape = 'u32[72,128]{1,0:T(1,128)}', space=vmem, size = 0x9000, scoped, tag = 'internal scratch']
  %s0 = inlined_call_operand.vmem [shape: f32[256,8], index: 0, kind: input, shape index: {}]
  %s1 = inlined_call_operand.vmem [shape: f32[8,32], index: 1, kind: input, shape index: {}]
  %s2 = inlined_call_operand.vmem [shape: f32[1,32], index: 2, kind: input, shape index: {}]
  %s3 = inlined_call_operand.vmem [shape: f32[32,128], index: 3, kind: input, shape index: {}]
  %s4 = inlined_call_operand.vmem [shape: f32[1,128], index: 4, kind: input, shape index: {}]
  %s5 = inlined_call_operand.hbm [shape: f32[256,128], index: 5, kind: output, shape index: {}]
  %s6 = sld [smem:[#allocation0]]
  $region30: #{tpu_custom_call.1} parent=0
    _
  %s8 = ssub.s32 1, %s6
  %s9 = scalar_select 0, %s8, %s6
  $region1: #{tpu_custom_call.1} parent=0
    #allocation2 [shape = 'u8[131072]{0}', space=vmem, size = 0x20000, scoped, tag = 'output window, operand 0, single buffered']
    #allocation3 [shape = 's32[1]{0}', space=sflag, size = 0x4, scoped, tag = 'scoped memory for tpu_custom_call.1']
    %10 = vsyncpa [#allocation3], 0
    // Predicated region
    $region2: #{tpu_custom_call.1} parent=1 // pred_check
      _
    $region3: #{tpu_custom_call.1} parent=1 // pred_check_branch
      %12 = sbr.rel (0) target = $region5
    $region4: #{tpu_custom_call.1} parent=1 // pred_region
      _
    $region5: #{tpu_custom_call.1} parent=1 // pred_fallthru
      _
    // Predicated region
    $region6: #{tpu_custom_call.1} parent=1 // pred_check
      _
    $region7: #{tpu_custom_call.1} parent=1 // pred_check_branch
      %14 = sbr.rel (0) target = $region9
    $region8: #{tpu_custom_call.1} parent=1 // pred_region
      _
    $region9: #{tpu_custom_call.1} parent=1 // pred_fallthru
      _
    // Predicated region
    $region10: #{tpu_custom_call.1} parent=1 // pred_check
      _
    $region11: #{tpu_custom_call.1} parent=1 // pred_check_branch
      %16 = sbr.rel (0) target = $region13
    $region12: #{tpu_custom_call.1} parent=1 // pred_region
      _
    $region13: #{tpu_custom_call.1} parent=1 // pred_fallthru
      _
    // Predicated region
    $region14: #{tpu_custom_call.1} parent=1 // pred_check
      _
    $region15: #{tpu_custom_call.1} parent=1 // pred_check_branch
      %18 = sbr.rel (0) target = $region17
    $region16: #{tpu_custom_call.1} parent=1 // pred_region
      _
    $region17: #{tpu_custom_call.1} parent=1 // pred_fallthru
      _
    // Predicated region
    $region18: #{tpu_custom_call.1} parent=1 // pred_check
      _
    $region19: #{tpu_custom_call.1} parent=1 // pred_check_branch
      %20 = sbr.rel (0) target = $region21
    $region20: #{tpu_custom_call.1} parent=1 // pred_region
      _
    $region21: #{tpu_custom_call.1} parent=1 // pred_fallthru
      _
    %v21 = vld [vmem:[%s0] sm:$0xff]
    %v22 = vld [vmem:[%s0 + $0x8] sm:$0xff]
    %v23 = vld [vmem:[%s0 + $0x10] sm:$0xff]
    %v24 = vld [vmem:[%s0 + $0x18] sm:$0xff]
    %v25 = vld [vmem:[%s0 + $0x20] sm:$0xff]
    %v26 = vld [vmem:[%s0 + $0x28] sm:$0xff]
    %v27 = vld [vmem:[%s0 + $0x30] sm:$0xff]
    %v28 = vld [vmem:[%s0 + $0x38] sm:$0xff]
    %v29 = vld [vmem:[%s0 + $0x40] sm:$0xff]
    %v30 = vld [vmem:[%s0 + $0x48] sm:$0xff]
    %v31 = vld [vmem:[%s0 + $0x50] sm:$0xff]
    %v32 = vld [vmem:[%s0 + $0x58] sm:$0xff]
    %v33 = vld [vmem:[%s0 + $0x60] sm:$0xff]
    %v34 = vld [vmem:[%s0 + $0x68] sm:$0xff]
    %v35 = vld [vmem:[%s0 + $0x70] sm:$0xff]
    %v36 = vld [vmem:[%s0 + $0x78] sm:$0xff]
    %v37 = vld [vmem:[%s0 + $0x80] sm:$0xff]
    %v38 = vld [vmem:[%s0 + $0x88] sm:$0xff]
    %v39 = vld [vmem:[%s0 + $0x90] sm:$0xff]
    %v40 = vld [vmem:[%s0 + $0x98] sm:$0xff]
    %v41 = vld [vmem:[%s0 + $0xa0] sm:$0xff]
    %v42 = vld [vmem:[%s0 + $0xa8] sm:$0xff]
    %v43 = vld [vmem:[%s0 + $0xb0] sm:$0xff]
    %v44 = vld [vmem:[%s0 + $0xb8] sm:$0xff]
    %v45 = vld [vmem:[%s0 + $0xc0] sm:$0xff]
    %v46 = vld [vmem:[%s0 + $0xc8] sm:$0xff]
    %v47 = vld [vmem:[%s0 + $0xd0] sm:$0xff]
    %v48 = vld [vmem:[%s0 + $0xd8] sm:$0xff]
    %v49 = vld [vmem:[%s0 + $0xe0] sm:$0xff]
    %v50 = vld [vmem:[%s0 + $0xe8] sm:$0xff]
    %v51 = vld [vmem:[%s0 + $0xf0] sm:$0xff]
    %v52 = vld [vmem:[%s0 + $0xf8] sm:$0xff]
    %v53 = vld [vmem:[%s1] sm:$0xff]
    %v54 = vld [vmem:[%s2] sm:$0x1]
    %v56 = vperm.slane %v54, 0
    %vm58 = vcmask 64512
    %v60 = vsel %vm58, %v21, 0
    %v63 = vsel %vm58, %v22, 0
    %v66 = vsel %vm58, %v23, 0
    %v69 = vsel %vm58, %v24, 0
    %v72 = vsel %vm58, %v25, 0
    %v75 = vsel %vm58, %v26, 0
    %v78 = vsel %vm58, %v27, 0
    %v81 = vsel %vm58, %v28, 0
    %v84 = vsel %vm58, %v29, 0
    %v87 = vsel %vm58, %v30, 0
    %v90 = vsel %vm58, %v31, 0
    %v93 = vsel %vm58, %v32, 0
    %v96 = vsel %vm58, %v33, 0
    %v99 = vsel %vm58, %v34, 0
    %v102 = vsel %vm58, %v35, 0
    %v105 = vsel %vm58, %v36, 0
    %v108 = vsel %vm58, %v37, 0
    %v111 = vsel %vm58, %v38, 0
    %v114 = vsel %vm58, %v39, 0
    %v117 = vsel %vm58, %v40, 0
    %v120 = vsel %vm58, %v41, 0
    %v123 = vsel %vm58, %v42, 0
    %v126 = vsel %vm58, %v43, 0
    %v129 = vsel %vm58, %v44, 0
    %v132 = vsel %vm58, %v45, 0
    %v135 = vsel %vm58, %v46, 0
    %v138 = vsel %vm58, %v47, 0
    %v141 = vsel %vm58, %v48, 0
    %v144 = vsel %vm58, %v49, 0
    %v147 = vsel %vm58, %v50, 0
    %v150 = vsel %vm58, %v51, 0
    %v153 = vsel %vm58, %v52, 0
    %155 = vmatpush.msra.mxu0 0.0
    %156 = vmatpush.msra.mxu0 0.0
    %157 = vmatpush.msra.mxu0 0.0
    %158 = vmatpush.msra.mxu0 0.0
    %159 = vmatpush.msra.mxu0 0.0
    %160 = vmatpush.msra.mxu0 0.0
    %161 = vmatpush.msra.mxu0 0.0
    %162 = vmatpush.msra.mxu0 0.0
    %163 = vmatpush.msra.mxu0 0.0
    %164 = vmatpush.msra.mxu0 0.0
    %165 = vmatpush.msra.mxu0 0.0
    %166 = vmatpush.msra.mxu0 0.0
    %167 = vmatpush.msra.mxu0 0.0
    %168 = vmatpush.msra.mxu0 0.0
    %169 = vmatpush.msra.mxu0 0.0
    %170 = vmatpush.msra.mxu0 %v53
    %171 = vmatmul.f32.gmra.mxu0 %v60
    %v172 = vpop.f32.mrf.mxu0
    %v173 = vadd.f32 %v56, %v172
    %174 = vmatmul.f32.gmra.mxu0 %v63
    %v175 = vpop.f32.mrf.mxu0
    %v176 = vadd.f32 %v56, %v175
    %177 = vmatmul.f32.gmra.mxu0 %v66
    %v178 = vpop.f32.mrf.mxu0
    %v179 = vadd.f32 %v56, %v178
    %180 = vmatmul.f32.gmra.mxu0 %v69
    %v181 = vpop.f32.mrf.mxu0
    %v182 = vadd.f32 %v56, %v181
    %183 = vmatmul.f32.gmra.mxu0 %v72
    %v184 = vpop.f32.mrf.mxu0
    %v185 = vadd.f32 %v56, %v184
    %186 = vmatmul.f32.gmra.mxu0 %v75
    %v187 = vpop.f32.mrf.mxu0
    %v188 = vadd.f32 %v56, %v187
    %189 = vmatmul.f32.gmra.mxu0 %v78
    %v190 = vpop.f32.mrf.mxu0
    %v191 = vadd.f32 %v56, %v190
    %192 = vmatmul.f32.gmra.mxu0 %v81
    %v193 = vpop.f32.mrf.mxu0
    %v194 = vadd.f32 %v56, %v193
    %195 = vmatmul.f32.gmra.mxu0 %v84
    %v196 = vpop.f32.mrf.mxu0
    %v197 = vadd.f32 %v56, %v196
    %198 = vmatmul.f32.gmra.mxu0 %v87
    %v199 = vpop.f32.mrf.mxu0
    %v200 = vadd.f32 %v56, %v199
    %201 = vmatmul.f32.gmra.mxu0 %v90
    %v202 = vpop.f32.mrf.mxu0
    %v203 = vadd.f32 %v56, %v202
    %204 = vmatmul.f32.gmra.mxu0 %v93
    %v205 = vpop.f32.mrf.mxu0
    %v206 = vadd.f32 %v56, %v205
    %207 = vmatmul.f32.gmra.mxu0 %v96
    %v208 = vpop.f32.mrf.mxu0
    %v209 = vadd.f32 %v56, %v208
    %210 = vmatmul.f32.gmra.mxu0 %v99
    %v211 = vpop.f32.mrf.mxu0
    %v212 = vadd.f32 %v56, %v211
    %213 = vmatmul.f32.gmra.mxu0 %v102
    %v214 = vpop.f32.mrf.mxu0
    %v215 = vadd.f32 %v56, %v214
    %216 = vmatmul.f32.gmra.mxu0 %v105
    %v217 = vpop.f32.mrf.mxu0
    %v218 = vadd.f32 %v56, %v217
    %219 = vmatmul.f32.gmra.mxu0 %v108
    %v220 = vpop.f32.mrf.mxu0
    %v221 = vadd.f32 %v56, %v220
    %222 = vmatmul.f32.gmra.mxu0 %v111
    %v223 = vpop.f32.mrf.mxu0
    %v224 = vadd.f32 %v56, %v223
    %225 = vmatmul.f32.gmra.mxu0 %v114
    %v226 = vpop.f32.mrf.mxu0
    %v227 = vadd.f32 %v56, %v226
    %228 = vmatmul.f32.gmra.mxu0 %v117
    %v229 = vpop.f32.mrf.mxu0
    %v230 = vadd.f32 %v56, %v229
    %231 = vmatmul.f32.gmra.mxu0 %v120
    %v232 = vpop.f32.mrf.mxu0
    %v233 = vadd.f32 %v56, %v232
    %234 = vmatmul.f32.gmra.mxu0 %v123
    %v235 = vpop.f32.mrf.mxu0
    %v236 = vadd.f32 %v56, %v235
    %237 = vmatmul.f32.gmra.mxu0 %v126
    %v238 = vpop.f32.mrf.mxu0
    %v239 = vadd.f32 %v56, %v238
    %240 = vmatmul.f32.gmra.mxu0 %v129
    %v241 = vpop.f32.mrf.mxu0
    %v242 = vadd.f32 %v56, %v241
    %243 = vmatmul.f32.gmra.mxu0 %v132
    %v244 = vpop.f32.mrf.mxu0
    %v245 = vadd.f32 %v56, %v244
    %246 = vmatmul.f32.gmra.mxu0 %v135
    %v247 = vpop.f32.mrf.mxu0
    %v248 = vadd.f32 %v56, %v247
    %249 = vmatmul.f32.gmra.mxu0 %v138
    %v250 = vpop.f32.mrf.mxu0
    %v251 = vadd.f32 %v56, %v250
    %252 = vmatmul.f32.gmra.mxu0 %v141
    %v253 = vpop.f32.mrf.mxu0
    %v254 = vadd.f32 %v56, %v253
    %255 = vmatmul.f32.gmra.mxu0 %v144
    %v256 = vpop.f32.mrf.mxu0
    %v257 = vadd.f32 %v56, %v256
    %258 = vmatmul.f32.gmra.mxu0 %v147
    %v259 = vpop.f32.mrf.mxu0
    %v260 = vadd.f32 %v56, %v259
    %261 = vmatmul.f32.gmra.mxu0 %v150
    %v262 = vpop.f32.mrf.mxu0
    %v263 = vadd.f32 %v56, %v262
    %264 = vmatmul.f32.gmra.mxu0 %v153
    %v265 = vpop.f32.mrf.mxu0
    %v266 = vadd.f32 %v56, %v265
    %267 = vdwg.mxu0
    %v268 = vmax.f32 %v173, 0.0
    %v269 = vmax.f32 %v176, 0.0
    %v270 = vmax.f32 %v179, 0.0
    %v271 = vmax.f32 %v182, 0.0
    %v272 = vmax.f32 %v185, 0.0
    %v273 = vmax.f32 %v188, 0.0
    %v274 = vmax.f32 %v191, 0.0
    %v275 = vmax.f32 %v194, 0.0
    %v276 = vmax.f32 %v197, 0.0
    %v277 = vmax.f32 %v200, 0.0
    %v278 = vmax.f32 %v203, 0.0
    %v279 = vmax.f32 %v206, 0.0
    %v280 = vmax.f32 %v209, 0.0
    %v281 = vmax.f32 %v212, 0.0
    %v282 = vmax.f32 %v215, 0.0
    %v283 = vmax.f32 %v218, 0.0
    %v284 = vmax.f32 %v221, 0.0
    %v285 = vmax.f32 %v224, 0.0
    %v286 = vmax.f32 %v227, 0.0
    %v287 = vmax.f32 %v230, 0.0
    %v288 = vmax.f32 %v233, 0.0
    %v289 = vmax.f32 %v236, 0.0
    %v290 = vmax.f32 %v239, 0.0
    %v291 = vmax.f32 %v242, 0.0
    %v292 = vmax.f32 %v245, 0.0
    %v293 = vmax.f32 %v248, 0.0
    %v294 = vmax.f32 %v251, 0.0
    %v295 = vmax.f32 %v254, 0.0
    %v296 = vmax.f32 %v257, 0.0
    %v297 = vmax.f32 %v260, 0.0
    %v298 = vmax.f32 %v263, 0.0
    %v299 = vmax.f32 %v266, 0.0
    %v300 = vld [vmem:[%s3] sm:$0xff]
    %v301 = vld [vmem:[%s3 + $0x8] sm:$0xff]
    %v302 = vld [vmem:[%s3 + $0x10] sm:$0xff]
    %v303 = vld [vmem:[%s3 + $0x18] sm:$0xff]
    %v304 = vld [vmem:[%s4] sm:$0x1]
    %v306 = vperm.slane %v304, 0
    %vm308 = vcmask 261120
    %v310 = vsel %vm308, %v268, 0
    %v313 = vsel %vm308, %v269, 0
    %v316 = vsel %vm308, %v270, 0
    %v319 = vsel %vm308, %v271, 0
    %v322 = vsel %vm308, %v272, 0
    %v325 = vsel %vm308, %v273, 0
    %v328 = vsel %vm308, %v274, 0
    %v331 = vsel %vm308, %v275, 0
    %v334 = vsel %vm308, %v276, 0
    %v337 = vsel %vm308, %v277, 0
    %v340 = vsel %vm308, %v278, 0
    %v343 = vsel %vm308, %v279, 0
    %v346 = vsel %vm308, %v280, 0
    %v349 = vsel %vm308, %v281, 0
    %v352 = vsel %vm308, %v282, 0
    %v355 = vsel %vm308, %v283, 0
    %v358 = vsel %vm308, %v284, 0
    %v361 = vsel %vm308, %v285, 0
    %v364 = vsel %vm308, %v286, 0
    %v367 = vsel %vm308, %v287, 0
    %v370 = vsel %vm308, %v288, 0
    %v373 = vsel %vm308, %v289, 0
    %v376 = vsel %vm308, %v290, 0
    %v379 = vsel %vm308, %v291, 0
    %v382 = vsel %vm308, %v292, 0
    %v385 = vsel %vm308, %v293, 0
    %v388 = vsel %vm308, %v294, 0
    %v391 = vsel %vm308, %v295, 0
    %v394 = vsel %vm308, %v296, 0
    %v397 = vsel %vm308, %v297, 0
    %v400 = vsel %vm308, %v298, 0
    %v403 = vsel %vm308, %v299, 0
    %405 = vmatpush.msra.mxu0 0.0
    %406 = vmatpush.msra.mxu0 0.0
    %407 = vmatpush.msra.mxu0 0.0
    %408 = vmatpush.msra.mxu0 0.0
    %409 = vmatpush.msra.mxu0 0.0
    %410 = vmatpush.msra.mxu0 0.0
    %411 = vmatpush.msra.mxu0 0.0
    %412 = vmatpush.msra.mxu0 0.0
    %413 = vmatpush.msra.mxu0 0.0
    %414 = vmatpush.msra.mxu0 0.0
    %415 = vmatpush.msra.mxu0 0.0
    %416 = vmatpush.msra.mxu0 0.0
    %417 = vmatpush.msra.mxu0 %v303
    %418 = vmatpush.msra.mxu0 %v302
    %419 = vmatpush.msra.mxu0 %v301
    %420 = vmatpush.msra.mxu0 %v300
    %421 = vmatmul.f32.gmra.mxu0 %v310
    %v422 = vpop.f32.mrf.mxu0
    %v423 = vadd.f32 %v306, %v422
    %424 = vmatmul.f32.gmra.mxu0 %v313
    %v425 = vpop.f32.mrf.mxu0
    %v426 = vadd.f32 %v306, %v425
    %427 = vmatmul.f32.gmra.mxu0 %v316
    %v428 = vpop.f32.mrf.mxu0
    %v429 = vadd.f32 %v306, %v428
    %430 = vmatmul.f32.gmra.mxu0 %v319
    %v431 = vpop.f32.mrf.mxu0
    %v432 = vadd.f32 %v306, %v431
    %433 = vmatmul.f32.gmra.mxu0 %v322
    %v434 = vpop.f32.mrf.mxu0
    %v435 = vadd.f32 %v306, %v434
    %436 = vmatmul.f32.gmra.mxu0 %v325
    %v437 = vpop.f32.mrf.mxu0
    %v438 = vadd.f32 %v306, %v437
    %439 = vmatmul.f32.gmra.mxu0 %v328
    %v440 = vpop.f32.mrf.mxu0
    %v441 = vadd.f32 %v306, %v440
    %442 = vmatmul.f32.gmra.mxu0 %v331
    %v443 = vpop.f32.mrf.mxu0
    %v444 = vadd.f32 %v306, %v443
    %445 = vmatmul.f32.gmra.mxu0 %v334
    %v446 = vpop.f32.mrf.mxu0
    %v447 = vadd.f32 %v306, %v446
    %448 = vmatmul.f32.gmra.mxu0 %v337
    %v449 = vpop.f32.mrf.mxu0
    %v450 = vadd.f32 %v306, %v449
    %451 = vmatmul.f32.gmra.mxu0 %v340
    %v452 = vpop.f32.mrf.mxu0
    %v453 = vadd.f32 %v306, %v452
    %454 = vmatmul.f32.gmra.mxu0 %v343
    %v455 = vpop.f32.mrf.mxu0
    %v456 = vadd.f32 %v306, %v455
    %457 = vmatmul.f32.gmra.mxu0 %v346
    %v458 = vpop.f32.mrf.mxu0
    %v459 = vadd.f32 %v306, %v458
    %460 = vmatmul.f32.gmra.mxu0 %v349
    %v461 = vpop.f32.mrf.mxu0
    %v462 = vadd.f32 %v306, %v461
    %463 = vmatmul.f32.gmra.mxu0 %v352
    %v464 = vpop.f32.mrf.mxu0
    %v465 = vadd.f32 %v306, %v464
    %466 = vmatmul.f32.gmra.mxu0 %v355
    %v467 = vpop.f32.mrf.mxu0
    %v468 = vadd.f32 %v306, %v467
    %469 = vmatmul.f32.gmra.mxu0 %v358
    %v470 = vpop.f32.mrf.mxu0
    %v471 = vadd.f32 %v306, %v470
    %472 = vmatmul.f32.gmra.mxu0 %v361
    %v473 = vpop.f32.mrf.mxu0
    %v474 = vadd.f32 %v306, %v473
    %475 = vmatmul.f32.gmra.mxu0 %v364
    %v476 = vpop.f32.mrf.mxu0
    %v477 = vadd.f32 %v306, %v476
    %478 = vmatmul.f32.gmra.mxu0 %v367
    %v479 = vpop.f32.mrf.mxu0
    %v480 = vadd.f32 %v306, %v479
    %481 = vmatmul.f32.gmra.mxu0 %v370
    %v482 = vpop.f32.mrf.mxu0
    %v483 = vadd.f32 %v306, %v482
    %484 = vmatmul.f32.gmra.mxu0 %v373
    %v485 = vpop.f32.mrf.mxu0
    %v486 = vadd.f32 %v306, %v485
    %487 = vmatmul.f32.gmra.mxu0 %v376
    %v488 = vpop.f32.mrf.mxu0
    %v489 = vadd.f32 %v306, %v488
    %490 = vmatmul.f32.gmra.mxu0 %v379
    %v491 = vpop.f32.mrf.mxu0
    %v492 = vadd.f32 %v306, %v491
    %493 = vmatmul.f32.gmra.mxu0 %v382
    %v494 = vpop.f32.mrf.mxu0
    %v495 = vadd.f32 %v306, %v494
    %496 = vmatmul.f32.gmra.mxu0 %v385
    %v497 = vpop.f32.mrf.mxu0
    %v498 = vadd.f32 %v306, %v497
    %499 = vmatmul.f32.gmra.mxu0 %v388
    %v500 = vpop.f32.mrf.mxu0
    %v501 = vadd.f32 %v306, %v500
    %502 = vmatmul.f32.gmra.mxu0 %v391
    %v503 = vpop.f32.mrf.mxu0
    %v504 = vadd.f32 %v306, %v503
    %505 = vmatmul.f32.gmra.mxu0 %v394
    %v506 = vpop.f32.mrf.mxu0
    %v507 = vadd.f32 %v306, %v506
    %508 = vmatmul.f32.gmra.mxu0 %v397
    %v509 = vpop.f32.mrf.mxu0
    %v510 = vadd.f32 %v306, %v509
    %511 = vmatmul.f32.gmra.mxu0 %v400
    %v512 = vpop.f32.mrf.mxu0
    %v513 = vadd.f32 %v306, %v512
    %514 = vmatmul.f32.gmra.mxu0 %v403
    %v515 = vpop.f32.mrf.mxu0
    %v516 = vadd.f32 %v306, %v515
    %517 = vdwg.mxu0
    %518 = vst [vmem:[#allocation2] sm:$0xff] %v423
    %519 = vst [vmem:[#allocation2 + $0x8] sm:$0xff] %v426
    %520 = vst [vmem:[#allocation2 + $0x10] sm:$0xff] %v429
    %521 = vst [vmem:[#allocation2 + $0x18] sm:$0xff] %v432
    %522 = vst [vmem:[#allocation2 + $0x20] sm:$0xff] %v435
    %523 = vst [vmem:[#allocation2 + $0x28] sm:$0xff] %v438
    %524 = vst [vmem:[#allocation2 + $0x30] sm:$0xff] %v441
    %525 = vst [vmem:[#allocation2 + $0x38] sm:$0xff] %v444
    %526 = vst [vmem:[#allocation2 + $0x40] sm:$0xff] %v447
    %527 = vst [vmem:[#allocation2 + $0x48] sm:$0xff] %v450
    %528 = vst [vmem:[#allocation2 + $0x50] sm:$0xff] %v453
    %529 = vst [vmem:[#allocation2 + $0x58] sm:$0xff] %v456
    %530 = vst [vmem:[#allocation2 + $0x60] sm:$0xff] %v459
    %531 = vst [vmem:[#allocation2 + $0x68] sm:$0xff] %v462
    %532 = vst [vmem:[#allocation2 + $0x70] sm:$0xff] %v465
    %533 = vst [vmem:[#allocation2 + $0x78] sm:$0xff] %v468
    %534 = vst [vmem:[#allocation2 + $0x80] sm:$0xff] %v471
    %535 = vst [vmem:[#allocation2 + $0x88] sm:$0xff] %v474
    %536 = vst [vmem:[#allocation2 + $0x90] sm:$0xff] %v477
    %537 = vst [vmem:[#allocation2 + $0x98] sm:$0xff] %v480
    %538 = vst [vmem:[#allocation2 + $0xa0] sm:$0xff] %v483
    %539 = vst [vmem:[#allocation2 + $0xa8] sm:$0xff] %v486
    %540 = vst [vmem:[#allocation2 + $0xb0] sm:$0xff] %v489
    %541 = vst [vmem:[#allocation2 + $0xb8] sm:$0xff] %v492
    %542 = vst [vmem:[#allocation2 + $0xc0] sm:$0xff] %v495
    %543 = vst [vmem:[#allocation2 + $0xc8] sm:$0xff] %v498
    %544 = vst [vmem:[#allocation2 + $0xd0] sm:$0xff] %v501
    %545 = vst [vmem:[#allocation2 + $0xd8] sm:$0xff] %v504
    %546 = vst [vmem:[#allocation2 + $0xe0] sm:$0xff] %v507
    %547 = vst [vmem:[#allocation2 + $0xe8] sm:$0xff] %v510
    %548 = vst [vmem:[#allocation2 + $0xf0] sm:$0xff] %v513
    %549 = vst [vmem:[#allocation2 + $0xf8] sm:$0xff] %v516
    // Predicated region
    $region22: #{tpu_custom_call.1} parent=1 // pred_check
      _
    $region23: #{tpu_custom_call.1} parent=1 // pred_check_branch
      %551 = sbr.rel (0) target = $region25
    $region24: #{tpu_custom_call.1} parent=1 // pred_region
      %553 = vsyncadd [#allocation3], 0
      %s554 = sshll.u32 [#allocation2], 4
      %s555 = int_to_ptr.vmem [resolvable:$true] %s554
      %s556 = sshll.u32 %s5, 4
      %s557 = int_to_ptr.hbm [resolvable:$true] %s556
      %562 = dma.vmem_to_hbm [thread:$0]  %s555, 4096, %s557, [#allocation3], 128, 128, 8
    $region25: #{tpu_custom_call.1} parent=1 // pred_fallthru
      _
    // Predicated region
    $region26: #{tpu_custom_call.1} parent=1 // pred_check
      _
    $region27: #{tpu_custom_call.1} parent=1 // pred_check_branch
      %564 = sbr.rel (0) target = $region29
    $region28: #{tpu_custom_call.1} parent=1 // pred_region
      %566 = dma.done [#allocation3], 4096
    $region29: #{tpu_custom_call.1} parent=1 // pred_fallthru
      _
    %567 = vsyncpa [#allocation3], 1

</llo_original>
